<compile_context>
chip_gen: v5e
topology: v5e:2x2
jax: 0.10.0
libtpu: 0.0.40
codegen_flags: <defaults>
</compile_context>

<pallas_src>
import jax
import jax.numpy as jnp
from jax import lax
from jax.experimental import pallas as pl
from jax.experimental.pallas import tpu as pltpu


def _round_up(x, m):
    return ((x + m - 1) // m) * m


def _choose_tb(batch, max_tb):
    """Pick the per-step batch tile (multiple of 8)."""
    max_tb = max(8, _round_up(max_tb, 8))
    tb_full = _round_up(batch, 8)
    if tb_full <= max_tb:
        if tb_full <= 1024:
            # Small problem: single grid step; splitting only adds overhead.
            return tb_full
        # Sizable batch that still fits one tile: keep >= 2 parallel grid
        # steps so both v7x TensorCores get work (harmless on v5e/v6e).
        return min(max_tb, _round_up(pl.cdiv(batch, 2), 8))
    return max_tb


def embed_action_kernel(x_ref, emb_ref, o_ref):
    # x_ref  : (TB, A) float input tile; action ids live in column 0.
    # emb_ref: (num_actions, latent_dim) full table, resident in VMEM.
    # o_ref  : (TB, latent_dim) output tile (natural shape, no lane padding).
    idx = x_ref[:, 0:1].astype(jnp.int32)                    # (TB, 1), trunc like .to(long)
    num_actions = emb_ref.shape[0]
    iota = lax.broadcasted_iota(jnp.int32, (idx.shape[0], num_actions), 1)
    one_hot = (idx == iota).astype(emb_ref.dtype)            # (TB, NA)
    # One small MXU pass replaces TB serial row gathers. K=NA is tiny but the
    # kernel is HBM-bound, so MXU efficiency does not matter here.
    o_ref[...] = jnp.dot(
        one_hot, emb_ref[...], preferred_element_type=jnp.float32
    ).astype(o_ref.dtype)


def embed_action(action_input, embedding, *, max_tb=4096):
    """action_input: (batch, A) float, action ids in column 0.
    embedding: (num_actions, latent_dim) float32. Returns (batch, latent_dim)."""
    batch, ncols = action_input.shape
    num_actions, latent_dim = embedding.shape

    tb = _choose_tb(batch, max_tb)
    grid = (pl.cdiv(batch, tb),)   # boundary block handled by Pallas masking

    return pl.pallas_call(
        embed_action_kernel,
        out_shape=jax.ShapeDtypeStruct((batch, latent_dim), embedding.dtype),
        grid_spec=pltpu.PrefetchScalarGridSpec(
            num_scalar_prefetch=0,
            grid=grid,
            in_specs=[
                # per-step tile of raw input rows (ids read in-kernel)
                pl.BlockSpec((tb, ncols), lambda i: (i, 0)),
                # whole (small) table resident every step; constant block index
                # so it is not re-fetched across grid steps
                pl.BlockSpec((num_actions, latent_dim), lambda i: (0, 0)),
            ],
            out_specs=pl.BlockSpec((tb, latent_dim), lambda i: (i, 0)),
        ),
        compiler_params=pltpu.CompilerParams(
            dimension_semantics=("parallel",),  # independent batch tiles
        ),
    )(action_input, embedding)


if __name__ == "__main__":
    num_actions = 10
    latent_dim = 32

    key = jax.random.PRNGKey(0)
    k_emb, k1, k2, k3 = jax.random.split(key, 4)

    # Deterministic "parameters" (torch.randn(num_actions, latent_dim) analogue)
    action_embedding = jax.random.normal(
        k_emb, (num_actions, latent_dim), dtype=jnp.float32
    )

    # Case 1: tiny batch (module-scale shapes), single grid step.
    batch1 = 8
    raw1 = jax.random.randint(k1, (batch1,), 0, num_actions)
    x1 = raw1[:, None].astype(jnp.float32)
    out1 = jax.block_until_ready(embed_action(x1, action_embedding))
    assert out1.shape == (batch1, latent_dim)
    assert jnp.allclose(out1, action_embedding[raw1]), "mismatch (small batch)"

    # Case 2: batch not a multiple of the tile -> exercises the cdiv grid and
    # masked boundary writeback (no pad/slice glue anywhere in the wrapper).
    batch2 = 1000
    raw2 = jax.random.randint(k2, (batch2,), 0, num_actions)
    x2 = raw2[:, None].astype(jnp.float32)
    out2 = jax.block_until_ready(embed_action(x2, action_embedding, max_tb=384))
    assert out2.shape == (batch2, latent_dim)
    assert jnp.allclose(out2, action_embedding[raw2]), "mismatch (tiled batch)"

    # Case 3: multi-column input (only column 0 is used) + batch not a
    # multiple of 8 (partial block within a single grid step).
    batch3 = 13
    raw3 = jax.random.randint(k3, (batch3,), 0, num_actions)
    extra = jax.random.normal(k3, (batch3, 2), dtype=jnp.float32)
    x3 = jnp.concatenate([raw3[:, None].astype(jnp.float32), extra], axis=1)
    out3 = jax.block_until_ready(embed_action(x3, action_embedding))
    assert out3.shape == (batch3, latent_dim)
    assert jnp.allclose(out3, action_embedding[raw3]), "mismatch (multi-col input)"

    print("KERNEL_OK")
</pallas_src>

<mosaic_0001>
module attributes {stable_mosaic.version = 11 : i64} {
  func.func @embed_action_kernel(%arg0: i32, %arg1: memref<8x1xf32, #tpu.memory_space<vmem>>, %arg2: memref<10x32xf32, #tpu.memory_space<vmem>>, %arg3: memref<8x32xf32, #tpu.memory_space<vmem>>) attributes {dimension_semantics = [#tpu.dimension_semantics<parallel>], iteration_bounds = array<i64: 1>, scalar_prefetch = 0 : i64, scratch_operands = 0 : i64, tpu.core_type = #tpu.core_type<tc>, window_params = [{transform_indices = @transform_0, window_bounds = array<i64: 8, 1>}, {pipeline_mode = #tpu.pipeline_mode<synchronous>, transform_indices = @transform_1, window_bounds = array<i64: 10, 32>}, {transform_indices = @transform_2, window_bounds = array<i64: 8, 32>}]} {
    %c0 = arith.constant 0 : index
    %c0_0 = arith.constant 0 : index
    %0 = vector.load %arg1[%c0, %c0_0] : memref<8x1xf32, #tpu.memory_space<vmem>>, vector<8x1xf32>
    %1 = arith.fptosi %0 : vector<8x1xf32> to vector<8x1xi32>
    %2 = tpu.iota {dimensions = array<i32: 1>} : vector<8x10xi32>
    %3 = vector.broadcast %1 : vector<8x1xi32> to vector<8x10xi32>
    %4 = arith.cmpi eq, %3, %2 : vector<8x10xi32>
    %5 = arith.extui %4 : vector<8x10xi1> to vector<8x10xi32>
    %6 = arith.sitofp %5 : vector<8x10xi32> to vector<8x10xf32>
    %c0_1 = arith.constant 0 : index
    %c0_2 = arith.constant 0 : index
    %7 = vector.load %arg2[%c0_1, %c0_2] : memref<10x32xf32, #tpu.memory_space<vmem>>, vector<10x32xf32>
    %cst = arith.constant dense<0.000000e+00> : vector<8x32xf32>
    %8 = tpu.matmul %6, %7, %cst {dimension_numbers = #tpu.dot_dimension_numbers<[1], [0], [0], [1], [0, 0, 1, 1], [], []>} : vector<8x10xf32>, vector<10x32xf32>, vector<8x32xf32> -> vector<8x32xf32>
    %c0_3 = arith.constant 0 : index
    %c0_4 = arith.constant 0 : index
    %9 = vector.load %arg3[%c0_3, %c0_4] : memref<8x32xf32, #tpu.memory_space<vmem>>, vector<8x32xf32>
    tpu.vector_store %arg3[%c0_3, %c0_4], %8 {strides = array<i32>} : memref<8x32xf32, #tpu.memory_space<vmem>>, vector<8x32xf32>,
    return
  }
  func.func @transform_0(%arg0: i32) -> (i32, i32) {
    %c0_i32 = arith.constant 0 : i32
    %c0_i32_0 = arith.constant 0 : i32
    return %arg0, %c0_i32 : i32, i32
  }
  func.func @transform_1(%arg0: i32) -> (i32, i32) {
    %c0_i32 = arith.constant 0 : i32
    %c0_i32_0 = arith.constant 0 : i32
    %c0_i32_1 = arith.constant 0 : i32
    return %c0_i32, %c0_i32_0 : i32, i32
  }
  func.func @transform_2(%arg0: i32) -> (i32, i32) {
    %c0_i32 = arith.constant 0 : i32
    %c0_i32_0 = arith.constant 0 : i32
    return %arg0, %c0_i32 : i32, i32
  }
}

</mosaic_0001>

<llo_original>
// kernel: tpu_custom_call.1
$region0: #{tpu_custom_call.1}
  #allocation0 [shape = 'u32[]', space=smem, size = 0x4, offset = 0x4, fixed_abs, tag = 'smem constant byte address 0x4 - core index']
  #allocation1 [shape = 'u32[72,128]{1,0:T(1,128)}', space=vmem, size = 0x9000, scoped, tag = 'internal scratch']
  %s0 = inlined_call_operand.vmem [shape: f32[8,1], index: 0, kind: input, shape index: {}]
  %s1 = inlined_call_operand.hbm [shape: f32[10,32], index: 1, kind: input, shape index: {}]
  %s2 = inlined_call_operand.hbm [shape: f32[8,32], index: 2, kind: output, shape index: {}]
  %s3 = sld [smem:[#allocation0]]
  $region22: #{tpu_custom_call.1} parent=0
    _
  %s5 = ssub.s32 1, %s3
  %s6 = scalar_select 0, %s5, %s3
  $region1: #{tpu_custom_call.1} parent=0
    #allocation2 [shape = 'u8[8192]{0}', space=vmem, size = 0x2000, scoped, tag = 'input window, operand 1, single buffered']
    #allocation3 [shape = 's32[1]{0}', space=sflag, size = 0x4, scoped, tag = 'scoped memory for tpu_custom_call.1']
    #allocation4 [shape = 's32[1]{0}', space=sflag, size = 0x4, scoped, tag = 'scoped memory for tpu_custom_call.1']
    #allocation5 [shape = 'u8[4096]{0}', space=vmem, size = 0x1000, scoped, tag = 'output window, operand 0, single buffered']
    %7 = vsyncpa [#allocation3], 0
    %8 = vsyncpa [#allocation4], 0
    // Predicated region
    $region2: #{tpu_custom_call.1} parent=1 // pred_check
      _
    $region3: #{tpu_custom_call.1} parent=1 // pred_check_branch
      %10 = sbr.rel (0) target = $region5
    $region4: #{tpu_custom_call.1} parent=1 // pred_region
      _
    $region5: #{tpu_custom_call.1} parent=1 // pred_fallthru
      _
    // Predicated region
    $region6: #{tpu_custom_call.1} parent=1 // pred_check
      _
    $region7: #{tpu_custom_call.1} parent=1 // pred_check_branch
      %12 = sbr.rel (0) target = $region9
    $region8: #{tpu_custom_call.1} parent=1 // pred_region
      %14 = vsyncadd [#allocation3], 0
      %s15 = sshll.u32 %s1, 4
      %s16 = int_to_ptr.hbm [resolvable:$true] %s15
      %s17 = sshll.u32 [#allocation2], 4
      %s18 = int_to_ptr.vmem [resolvable:$true] %s17
      %23 = dma.hbm_to_vmem [thread:$0]  %s16, 256, %s18, [#allocation3], 128, 128, 8
    $region9: #{tpu_custom_call.1} parent=1 // pred_fallthru
      _
    // Predicated region
    $region10: #{tpu_custom_call.1} parent=1 // pred_check
      _
    $region11: #{tpu_custom_call.1} parent=1 // pred_check_branch
      %25 = sbr.rel (0) target = $region13
    $region12: #{tpu_custom_call.1} parent=1 // pred_region
      %27 = dma.done [#allocation3], 256
    $region13: #{tpu_custom_call.1} parent=1 // pred_fallthru
      _
    %v28 = vld [vmem:[%s0] sm:$0xff]
    %v29 = vcvt.f32.s32.to.zero.pseudo %v28
    %v30 = vlaneseq
    %v31 = vand.u32 %v30, 127
    %32 = vset.pattern.permute.xlu0 0
    %33 = vperm.xlu0 %32, %v29
    %v34 = vpop.permute.xlu0 %33
    %vm35 = vcmp.eq.s32.totalorder %v34, %v31
    %v36 = vsel %vm35, 1, 0
    %v37 = vcvt.s32.f32 %v36
    %v38 = vld [vmem:[#allocation2] sm:$0xff]
    %v39 = vld [vmem:[#allocation2 + $0x8] sm:$0x3]
    %vm40 = vcmask 80896
    %v42 = vsel %vm40, %v37, 0
    %vm44 = vcmask 1041408
    %v46 = vsel %vm44, %v39, 0
    %48 = vmatpush.msra.mxu0 0.0
    %49 = vmatpush.msra.mxu0 0.0
    %50 = vmatpush.msra.mxu0 0.0
    %51 = vmatpush.msra.mxu0 0.0
    %52 = vmatpush.msra.mxu0 0.0
    %53 = vmatpush.msra.mxu0 0.0
    %54 = vmatpush.msra.mxu0 0.0
    %55 = vmatpush.msra.mxu0 0.0
    %56 = vmatpush.msra.mxu0 0.0
    %57 = vmatpush.msra.mxu0 0.0
    %58 = vmatpush.msra.mxu0 0.0
    %59 = vmatpush.msra.mxu0 0.0
    %60 = vmatpush.msra.mxu0 0.0
    %61 = vmatpush.msra.mxu0 0.0
    %62 = vmatpush.msra.mxu0 %v46
    %63 = vmatpush.msra.mxu0 %v38
    %64 = vmatmul.f32.gmra.mxu0 %v42
    %v65 = vpop.f32.mrf.mxu0
    %v66 = vadd.f32 0.0, %v65
    %67 = vdwg.mxu0
    %vm68 = vcmask 261120
    %69 = vst.msk [vmem:[#allocation5] sm:$0xff] %vm68, %v66
    // Predicated region
    $region14: #{tpu_custom_call.1} parent=1 // pred_check
      _
    $region15: #{tpu_custom_call.1} parent=1 // pred_check_branch
      %71 = sbr.rel (0) target = $region17
    $region16: #{tpu_custom_call.1} parent=1 // pred_region
      %73 = vsyncadd [#allocation4], 0
      %s75 = sshll.u32 [#allocation5], 4
      %s76 = int_to_ptr.vmem [resolvable:$true] %s75
      %s77 = sshll.u32 %s2, 4
      %s78 = int_to_ptr.hbm [resolvable:$true] %s77
      %80 = dma.vmem_to_hbm [thread:$0]  %s76, 128, %s78, [#allocation4]
    $region17: #{tpu_custom_call.1} parent=1 // pred_fallthru
      _
    // Predicated region
    $region18: #{tpu_custom_call.1} parent=1 // pred_check
      _
    $region19: #{tpu_custom_call.1} parent=1 // pred_check_branch
      %82 = sbr.rel (0) target = $region21
    $region20: #{tpu_custom_call.1} parent=1 // pred_region
      %84 = dma.done [#allocation4], 128
    $region21: #{tpu_custom_call.1} parent=1 // pred_fallthru
      _
    %85 = vsyncpa [#allocation3], 1
    %86 = vsyncpa [#allocation4], 1

</llo_original>
